<compile_context>
chip_gen: v7x
topology: tpu7x:2x2x1
jax: 0.10.0
libtpu: 0.0.40
codegen_flags: <defaults>
</compile_context>

<pallas_src>
import jax
import jax.numpy as jnp
from jax import lax
from jax.experimental import pallas as pl
from jax.experimental.pallas import tpu as pltpu


def _round_up(v, m):
    return (v + m - 1) // m * m


def _sublane_pack(dtype):
    # (8,128) vreg tile packs sub-32-bit dtypes along sublanes:
    # f32 -> 8 rows, bf16 -> 16, int8/fp8 -> 32.
    return 8 * max(1, 4 // jnp.dtype(dtype).itemsize)


# ---------------------------------------------------------------------------
# Kernels
# ---------------------------------------------------------------------------

def _lora_linear_kernel(x_ref, w_ref, xa_ref, b_ref, bias_ref, out_ref, acc_ref):
    """out = x @ W^T + (x @ A^T) @ B^T + bias, K tiled along the last grid axis."""
    k = pl.program_id(2)

    @pl.when(k == 0)
    def _init():
        acc_ref[...] = jnp.zeros_like(acc_ref)

    # Main matmul: transposed contraction ((1,),(1,)) -> no XLU transpose,
    # native-dtype MXU operands, f32 accumulation in VMEM scratch.
    acc_ref[...] += lax.dot_general(
        x_ref[...], w_ref[...],
        dimension_numbers=(((1,), (1,)), ((), ())),
        preferred_element_type=jnp.float32,
    )

    @pl.when(k == pl.num_programs(2) - 1)
    def _finalize():
        # LoRA epilogue ONCE per (i, j) output tile: precomputed (x@A^T) tile
        # [tm, r_pad] contracted with B tile [tn, r_pad] -> [tm, tn].
        lora = lax.dot_general(
            xa_ref[...], b_ref[...],
            dimension_numbers=(((1,), (1,)), ((), ())),
            preferred_element_type=jnp.float32,
        )
        out_ref[...] = (acc_ref[...] + lora + bias_ref[...]).astype(out_ref.dtype)


def _plain_linear_kernel(x_ref, w_ref, bias_ref, out_ref, acc_ref):
    """LoRA-disabled / rank-0 path: out = x @ W^T + bias."""
    k = pl.program_id(2)

    @pl.when(k == 0)
    def _init():
        acc_ref[...] = jnp.zeros_like(acc_ref)

    acc_ref[...] += lax.dot_general(
        x_ref[...], w_ref[...],
        dimension_numbers=(((1,), (1,)), ((), ())),
        preferred_element_type=jnp.float32,
    )

    @pl.when(k == pl.num_programs(2) - 1)
    def _finalize():
        out_ref[...] = (acc_ref[...] + bias_ref[...]).astype(out_ref.dtype)


# ---------------------------------------------------------------------------
# One-time (model-load) parameter preparation: pad static tensors ONCE.
# ---------------------------------------------------------------------------

def prepare_column_parallel_lora_params(weight, lora_A, lora_B, bias,
                                        *, tn=512, tk=512):
    """weight: [N, K]; lora_A: [r, K] | None; lora_B: [N, r] | None; bias: [N] | None."""
    N, K = weight.shape
    wdtype = weight.dtype

    tn = min(tn, _round_up(N, 128))
    tk = min(tk, _round_up(K, 128))
    # v7x megacore: if the whole N dimension fits a single tile but is big
    # enough to split, use >= 2 parallel j blocks so both TensorCores get work.
    if 256 <= _round_up(N, 128) <= tn:
        tn = _round_up(_round_up(N, 128) // 2, 128)

    Np = _round_up(N, tn)
    Kp = _round_up(K, tk)

    w_p = weight if (Np == N and Kp == K) else jnp.pad(
        weight, ((0, Np - N), (0, Kp - K)))

    if bias is None:
        bias_p = jnp.zeros((1, Np), dtype=wdtype)
    else:
        bias_p = (bias if Np == N else jnp.pad(bias, (0, Np - N))).reshape(1, Np)

    has_lora = lora_A is not None and lora_B is not None and lora_A.shape[0] > 0
    if has_lora:
        r = lora_A.shape[0]
        assert lora_A.shape == (r, K) and lora_B.shape == (N, r)
        r_pad = _round_up(r, 128)   # lane-align the tiny LoRA rank once, in HBM
        a_p = jnp.pad(lora_A.astype(wdtype), ((0, r_pad - r), (0, Kp - K)))
        b_p = jnp.pad(lora_B.astype(wdtype), ((0, Np - N), (0, r_pad - r)))
    else:
        r_pad, a_p, b_p = 0, None, None

    return dict(w_p=w_p, a_p=a_p, b_p=b_p, bias_p=bias_p,
                N=N, K=K, Np=Np, Kp=Kp, tn=tn, tk=tk, r_pad=r_pad)


# ---------------------------------------------------------------------------
# Per-call forward (hot path): only pads activations.
# ---------------------------------------------------------------------------

def column_parallel_linear_with_lora_apply(x, params, *, tm=256):
    """x: [..., K].  Returns (output [..., N], output_bias=None)."""
    N, K = params["N"], params["K"]
    Np, Kp = params["Np"], params["Kp"]
    tn, tk, r_pad = params["tn"], params["tk"], params["r_pad"]
    w_p, bias_p = params["w_p"], params["bias_p"]

    lead_shape = x.shape[:-1]
    assert x.shape[-1] == K
    x2 = x.reshape(-1, K)
    M = x2.shape[0]

    pack = _sublane_pack(x.dtype)
    tm = min(tm, _round_up(M, pack))
    Mp = _round_up(M, tm)

    x_p = x2 if (Mp == M and Kp == K) else jnp.pad(
        x2, ((0, Mp - M), (0, Kp - K)))

    grid = (Mp // tm, Np // tn, Kp // tk)
    compiler_params = pltpu.CompilerParams(
        dimension_semantics=("parallel", "parallel", "arbitrary"))

    if params["a_p"] is not None:
        # Hoisted skinny LoRA GEMM (depends only on M, K): computed once per
        # call instead of once per (i, j, k) grid step.  Cast back to the
        # activation dtype so the in-kernel epilogue feeds native-dtype
        # operands to the MXU (bf16-native on v6e/v7x).
        xa = lax.dot_general(
            x_p, params["a_p"],
            dimension_numbers=(((1,), (1,)), ((), ())),
            preferred_element_type=jnp.float32,
        ).astype(x.dtype)

        out_p = pl.pallas_call(
            _lora_linear_kernel,
            out_shape=jax.ShapeDtypeStruct((Mp, Np), x.dtype),
            grid_spec=pltpu.PrefetchScalarGridSpec(
                num_scalar_prefetch=0,
                grid=grid,
                in_specs=[
                    pl.BlockSpec((tm, tk), lambda i, j, k: (i, k)),     # x tile
                    pl.BlockSpec((tn, tk), lambda i, j, k: (j, k)),     # W tile
                    pl.BlockSpec((tm, r_pad), lambda i, j, k: (i, 0)),  # x@A^T tile
                    pl.BlockSpec((tn, r_pad), lambda i, j, k: (j, 0)),  # lora_B tile
                    pl.BlockSpec((1, tn), lambda i, j, k: (0, j)),      # bias tile
                ],
                out_specs=pl.BlockSpec((tm, tn), lambda i, j, k: (i, j)),
                scratch_shapes=[pltpu.VMEM((tm, tn), jnp.float32)],     # accumulator
            ),
            compiler_params=compiler_params,
        )(x_p, w_p, xa, params["b_p"], bias_p)
    else:
        out_p = pl.pallas_call(
            _plain_linear_kernel,
            out_shape=jax.ShapeDtypeStruct((Mp, Np), x.dtype),
            grid_spec=pltpu.PrefetchScalarGridSpec(
                num_scalar_prefetch=0,
                grid=grid,
                in_specs=[
                    pl.BlockSpec((tm, tk), lambda i, j, k: (i, k)),
                    pl.BlockSpec((tn, tk), lambda i, j, k: (j, k)),
                    pl.BlockSpec((1, tn), lambda i, j, k: (0, j)),
                ],
                out_specs=pl.BlockSpec((tm, tn), lambda i, j, k: (i, j)),
                scratch_shapes=[pltpu.VMEM((tm, tn), jnp.float32)],
            ),
            compiler_params=compiler_params,
        )(x_p, w_p, bias_p)

    out = out_p if (Mp == M and Np == N) else out_p[:M, :N]
    out = out.reshape(*lead_shape, N)
    # gather_output with tp_size=1 is identity; skip_bias_add=False -> bias is
    # folded into output and output_bias is None.
    # TODO(synk): tensor_model_parallel_all_gather / DTensor-FSDP re-sharding
    # have no single-device Pallas equivalent and are omitted (tp_size=1).
    return out, None


def column_parallel_linear_with_lora(x, weight, lora_A, lora_B, bias,
                                     *, tm=256, tn=512, tk=512):
    """Convenience wrapper (demo/tests): prepare statics then apply.
    In a real model, call prepare_column_parallel_lora_params once at load."""
    params = prepare_column_parallel_lora_params(weight, lora_A, lora_B, bias,
                                                 tn=tn, tk=tk)
    return column_parallel_linear_with_lora_apply(x, params, tm=tm)


if __name__ == "__main__":
    # Small, deterministic example shapes consistent with the module.
    batch, seq = 2, 8            # M = 16 rows
    in_features = 32             # K
    out_features = 64            # N (single tp shard)
    rank = 4                     # LoRA rank

    M = batch * seq
    key = jax.random.PRNGKey(0)
    kx, kw, ka, kb, kbias = jax.random.split(key, 5)

    x = jax.random.normal(kx, (M, in_features), dtype=jnp.float32)
    weight = jax.random.normal(kw, (out_features, in_features), dtype=jnp.float32) * 0.05
    lora_A = jax.random.normal(ka, (rank, in_features), dtype=jnp.float32) * 0.05
    lora_B = jax.random.normal(kb, (out_features, rank), dtype=jnp.float32) * 0.05
    bias = jax.random.normal(kbias, (out_features,), dtype=jnp.float32) * 0.05

    # Statics padded once (model-load time); hot path only pads x.
    params = prepare_column_parallel_lora_params(weight, lora_A, lora_B, bias)
    out, out_bias = column_parallel_linear_with_lora_apply(x, params)
    out = jax.block_until_ready(out)

    # Pure-JAX reference check (merged-weight semantics).
    w_eff = weight + lora_B @ lora_A
    ref = x @ w_eff.T + bias[None, :]
    assert out.shape == (M, out_features)
    assert out_bias is None
    assert jnp.allclose(out, ref, atol=1e-4, rtol=1e-4), "mismatch vs reference"

    # Also exercise the LoRA-disabled (rank-0) fallback path.
    params_nolora = prepare_column_parallel_lora_params(weight, None, None, bias)
    out2, _ = column_parallel_linear_with_lora_apply(x, params_nolora)
    out2 = jax.block_until_ready(out2)
    assert jnp.allclose(out2, x @ weight.T + bias[None, :], atol=1e-4, rtol=1e-4)

    print("KERNEL_OK")
</pallas_src>

<mosaic_0001>
module attributes {stable_mosaic.version = 11 : i64} {
  func.func @_lora_linear_kernel(%arg0: i32, %arg1: i32, %arg2: i32, %arg3: memref<16x128xf32, #tpu.memory_space<vmem>>, %arg4: memref<128x128xf32, #tpu.memory_space<vmem>>, %arg5: memref<16x128xf32, #tpu.memory_space<vmem>>, %arg6: memref<128x128xf32, #tpu.memory_space<vmem>>, %arg7: memref<1x128xf32, #tpu.memory_space<vmem>>, %arg8: memref<16x128xf32, #tpu.memory_space<vmem>>, %arg9: memref<16x128xf32, #tpu.memory_space<vmem>>) attributes {dimension_semantics = [#tpu.dimension_semantics<parallel>, #tpu.dimension_semantics<parallel>, #tpu.dimension_semantics<arbitrary>], iteration_bounds = array<i64: 1, 1, 1>, scalar_prefetch = 0 : i64, scratch_operands = 1 : i64, tpu.core_type = #tpu.core_type<tc>, window_params = [{transform_indices = @transform_0, window_bounds = array<i64: 16, 128>}, {transform_indices = @transform_1, window_bounds = array<i64: 128, 128>}, {transform_indices = @transform_2, window_bounds = array<i64: 16, 128>}, {transform_indices = @transform_3, window_bounds = array<i64: 128, 128>}, {transform_indices = @transform_4, window_bounds = array<i64: 1, 128>}, {transform_indices = @transform_5, window_bounds = array<i64: 16, 128>}]} {
    %c0_i32 = arith.constant 0 : i32
    %0 = arith.cmpi eq, %arg2, %c0_i32 : i32
    %1 = arith.extui %0 : i1 to i32
    %c0_i32_0 = arith.constant 0 : i32
    %2 = arith.cmpi ne, %1, %c0_i32_0 : i32
    scf.if %2 {
      %cst_10 = arith.constant 0.000000e+00 : f32
      %12 = vector.broadcast %cst_10 : f32 to vector<16x128xf32>
      %c0_11 = arith.constant 0 : index
      %c0_12 = arith.constant 0 : index
      %13 = vector.load %arg9[%c0_11, %c0_12] : memref<16x128xf32, #tpu.memory_space<vmem>>, vector<16x128xf32>
      tpu.vector_store %arg9[%c0_11, %c0_12], %12 {strides = array<i32>} : memref<16x128xf32, #tpu.memory_space<vmem>>, vector<16x128xf32>,
    } else {
    }
    %c0 = arith.constant 0 : index
    %c0_1 = arith.constant 0 : index
    %3 = vector.load %arg9[%c0, %c0_1] : memref<16x128xf32, #tpu.memory_space<vmem>>, vector<16x128xf32>
    %c0_2 = arith.constant 0 : index
    %c0_3 = arith.constant 0 : index
    %4 = vector.load %arg3[%c0_2, %c0_3] : memref<16x128xf32, #tpu.memory_space<vmem>>, vector<16x128xf32>
    %c0_4 = arith.constant 0 : index
    %c0_5 = arith.constant 0 : index
    %5 = vector.load %arg4[%c0_4, %c0_5] : memref<128x128xf32, #tpu.memory_space<vmem>>, vector<128x128xf32>
    %cst = arith.constant dense<0.000000e+00> : vector<16x128xf32>
    %6 = tpu.matmul %4, %5, %cst {dimension_numbers = #tpu.dot_dimension_numbers<[1], [1], [0], [0], [0, 0, 1, 0], [], []>} : vector<16x128xf32>, vector<128x128xf32>, vector<16x128xf32> -> vector<16x128xf32>
    %7 = arith.addf %3, %6 : vector<16x128xf32>
    %c0_6 = arith.constant 0 : index
    %c0_7 = arith.constant 0 : index
    %8 = vector.load %arg9[%c0_6, %c0_7] : memref<16x128xf32, #tpu.memory_space<vmem>>, vector<16x128xf32>
    tpu.vector_store %arg9[%c0_6, %c0_7], %7 {strides = array<i32>} : memref<16x128xf32, #tpu.memory_space<vmem>>, vector<16x128xf32>,
    %c0_i32_8 = arith.constant 0 : i32
    %9 = arith.cmpi eq, %arg2, %c0_i32_8 : i32
    %10 = arith.extui %9 : i1 to i32
    %c0_i32_9 = arith.constant 0 : i32
    %11 = arith.cmpi ne, %10, %c0_i32_9 : i32
    scf.if %11 {
      %c0_10 = arith.constant 0 : index
      %c0_11 = arith.constant 0 : index
      %12 = vector.load %arg5[%c0_10, %c0_11] : memref<16x128xf32, #tpu.memory_space<vmem>>, vector<16x128xf32>
      %c0_12 = arith.constant 0 : index
      %c0_13 = arith.constant 0 : index
      %13 = vector.load %arg6[%c0_12, %c0_13] : memref<128x128xf32, #tpu.memory_space<vmem>>, vector<128x128xf32>
      %cst_14 = arith.constant dense<0.000000e+00> : vector<16x128xf32>
      %14 = tpu.matmul %12, %13, %cst_14 {dimension_numbers = #tpu.dot_dimension_numbers<[1], [1], [0], [0], [0, 0, 1, 0], [], []>} : vector<16x128xf32>, vector<128x128xf32>, vector<16x128xf32> -> vector<16x128xf32>
      %c0_15 = arith.constant 0 : index
      %c0_16 = arith.constant 0 : index
      %15 = vector.load %arg9[%c0_15, %c0_16] : memref<16x128xf32, #tpu.memory_space<vmem>>, vector<16x128xf32>
      %16 = arith.addf %15, %14 : vector<16x128xf32>
      %c0_17 = arith.constant 0 : index
      %c0_18 = arith.constant 0 : index
      %17 = vector.load %arg7[%c0_17, %c0_18] : memref<1x128xf32, #tpu.memory_space<vmem>>, vector<1x128xf32>
      %18 = vector.broadcast %17 : vector<1x128xf32> to vector<16x128xf32>
      %19 = arith.addf %16, %18 : vector<16x128xf32>
      %c0_19 = arith.constant 0 : index
      %c0_20 = arith.constant 0 : index
      %20 = vector.load %arg8[%c0_19, %c0_20] : memref<16x128xf32, #tpu.memory_space<vmem>>, vector<16x128xf32>
      tpu.vector_store %arg8[%c0_19, %c0_20], %19 {strides = array<i32>} : memref<16x128xf32, #tpu.memory_space<vmem>>, vector<16x128xf32>,
    } else {
    }
    return
  }
  func.func @transform_0(%arg0: i32, %arg1: i32, %arg2: i32) -> (i32, i32) {
    %c0_i32 = arith.constant 0 : i32
    return %arg0, %arg2 : i32, i32
  }
  func.func @transform_1(%arg0: i32, %arg1: i32, %arg2: i32) -> (i32, i32) {
    %c0_i32 = arith.constant 0 : i32
    return %arg1, %arg2 : i32, i32
  }
  func.func @transform_2(%arg0: i32, %arg1: i32, %arg2: i32) -> (i32, i32) {
    %c0_i32 = arith.constant 0 : i32
    %c0_i32_0 = arith.constant 0 : i32
    return %arg0, %c0_i32 : i32, i32
  }
  func.func @transform_3(%arg0: i32, %arg1: i32, %arg2: i32) -> (i32, i32) {
    %c0_i32 = arith.constant 0 : i32
    %c0_i32_0 = arith.constant 0 : i32
    return %arg1, %c0_i32 : i32, i32
  }
  func.func @transform_4(%arg0: i32, %arg1: i32, %arg2: i32) -> (i32, i32) {
    %c0_i32 = arith.constant 0 : i32
    %c0_i32_0 = arith.constant 0 : i32
    return %c0_i32, %arg1 : i32, i32
  }
  func.func @transform_5(%arg0: i32, %arg1: i32, %arg2: i32) -> (i32, i32) {
    %c0_i32 = arith.constant 0 : i32
    return %arg0, %arg1 : i32, i32
  }
}

</mosaic_0001>

<llo_original>
// kernel: tpu_custom_call.1
$region0: #{tpu_custom_call.1}
  #allocation0 [shape = 'u32[]', space=smem, size = 0x4, offset = 0x4, fixed_abs, tag = 'smem constant byte address 0x4 - core index']
  #allocation1 [shape = 'u32[144,128]{1,0:T(1,128)}', space=vmem, size = 0x12000, scoped, tag = 'internal scratch']
  #allocation2 [shape = 'f32[16,128]{1,0:T(8,128)}', space=vmem, size = 0x2000, scoped, tag = 'scratch operand']
  %s0 = inlined_call_operand.hbm [shape: f32[16,128], index: 0, kind: input, shape index: {}]
  %s1 = inlined_call_operand.hbm [shape: f32[128,128], index: 1, kind: input, shape index: {}]
  %s2 = inlined_call_operand.hbm [shape: f32[16,128], index: 2, kind: input, shape index: {}]
  %s3 = inlined_call_operand.hbm [shape: f32[128,128], index: 3, kind: input, shape index: {}]
  %s4 = inlined_call_operand.vmem [shape: f32[1,128], index: 4, kind: input, shape index: {}]
  %s5 = inlined_call_operand.hbm [shape: f32[16,128], index: 5, kind: output, shape index: {}]
  %s6 = sld [smem:[#allocation0]]
  $region54: #{tpu_custom_call.1} parent=0
    _
  %s8 = ssub.s32 1, %s6
  %s9 = scalar_select 0, %s8, %s6
  $region1: #{tpu_custom_call.1} parent=0
    #allocation3 [shape = 'u8[8192]{0}', space=vmem, size = 0x2000, scoped, tag = 'input window, operand 0, single buffered']
    #allocation4 [shape = 's32[1]{0}', space=sflag, size = 0x4, scoped, tag = 'scoped memory for tpu_custom_call.1']
    #allocation5 [shape = 's32[1]{0}', space=sflag, size = 0x4, scoped, tag = 'scoped memory for tpu_custom_call.1']
    #allocation6 [shape = 'u8[65536]{0}', space=vmem, size = 0x10000, scoped, tag = 'input window, operand 1, single buffered']
    #allocation7 [shape = 's32[1]{0}', space=sflag, size = 0x4, scoped, tag = 'scoped memory for tpu_custom_call.1']
    #allocation8 [shape = 'u8[8192]{0}', space=vmem, size = 0x2000, scoped, tag = 'input window, operand 2, single buffered']
    #allocation9 [shape = 'u8[65536]{0}', space=vmem, size = 0x10000, scoped, tag = 'input window, operand 3, single buffered']
    #allocation10 [shape = 's32[1]{0}', space=sflag, size = 0x4, scoped, tag = 'scoped memory for tpu_custom_call.1']
    #allocation11 [shape = 'u8[8192]{0}', space=vmem, size = 0x2000, scoped, tag = 'output window, operand 0, single buffered']
    %10 = vsyncpa [#allocation4], 0
    %11 = vsyncpa [#allocation7], 0
    %12 = vsyncpa [#allocation10], 0
    %13 = vsyncpa [#allocation5], 0
    // Predicated region
    $region2: #{tpu_custom_call.1} parent=1 // pred_check
      _
    $region3: #{tpu_custom_call.1} parent=1 // pred_check_branch
      %15 = sbr.rel (0) target = $region5
    $region4: #{tpu_custom_call.1} parent=1 // pred_region
      %s17 = ssub.s32 256, 256
      %18 = vsyncadd [#allocation4], %s17
      %s19 = sshll.u32 [#allocation3], 4
      %s20 = int_to_ptr.vmem [resolvable:$true] %s19
      %25 = dma.hbm_to_vmem [thread:$0]  %s0, 256, %s20, [#allocation4], 128, 128, 8
    $region5: #{tpu_custom_call.1} parent=1 // pred_fallthru
      _
    // Predicated region
    $region6: #{tpu_custom_call.1} parent=1 // pred_check
      _
    $region7: #{tpu_custom_call.1} parent=1 // pred_check_branch
      %27 = sbr.rel (0) target = $region9
    $region8: #{tpu_custom_call.1} parent=1 // pred_region
      %s29 = ssub.s32 2048, 2048
      %30 = vsyncadd [#allocation7], %s29
      %s31 = sshll.u32 [#allocation6], 4
      %s32 = int_to_ptr.vmem [resolvable:$true] %s31
      %37 = dma.hbm_to_vmem [thread:$0]  %s1, 2048, %s32, [#allocation7], 128, 128, 8
    $region9: #{tpu_custom_call.1} parent=1 // pred_fallthru
      _
    // Predicated region
    $region10: #{tpu_custom_call.1} parent=1 // pred_check
      _
    $region11: #{tpu_custom_call.1} parent=1 // pred_check_branch
      %39 = sbr.rel (0) target = $region13
    $region12: #{tpu_custom_call.1} parent=1 // pred_region
      %s41 = ssub.s32 256, 256
      %42 = vsyncadd [#allocation7], %s41
      %s43 = sshll.u32 [#allocation8], 4
      %s44 = int_to_ptr.vmem [resolvable:$true] %s43
      %49 = dma.hbm_to_vmem [thread:$0]  %s2, 256, %s44, [#allocation7], 128, 128, 8
    $region13: #{tpu_custom_call.1} parent=1 // pred_fallthru
      _
    // Predicated region
    $region14: #{tpu_custom_call.1} parent=1 // pred_check
      _
    $region15: #{tpu_custom_call.1} parent=1 // pred_check_branch
      %51 = sbr.rel (0) target = $region17
    $region16: #{tpu_custom_call.1} parent=1 // pred_region
      %s53 = ssub.s32 2048, 2048
      %54 = vsyncadd [#allocation10], %s53
      %s55 = sshll.u32 [#allocation9], 4
      %s56 = int_to_ptr.vmem [resolvable:$true] %s55
      %61 = dma.hbm_to_vmem [thread:$0]  %s3, 2048, %s56, [#allocation10], 128, 128, 8
    $region17: #{tpu_custom_call.1} parent=1 // pred_fallthru
      _
    // Predicated region
    $region18: #{tpu_custom_call.1} parent=1 // pred_check
      _
    $region19: #{tpu_custom_call.1} parent=1 // pred_check_branch
      %63 = sbr.rel (0) target = $region21
    $region20: #{tpu_custom_call.1} parent=1 // pred_region
      _
    $region21: #{tpu_custom_call.1} parent=1 // pred_fallthru
      _
    // Predicated region
    $region22: #{tpu_custom_call.1} parent=1 // pred_check
      _
    $region23: #{tpu_custom_call.1} parent=1 // pred_check_branch
      %65 = sbr.rel (0) target = $region25
    $region24: #{tpu_custom_call.1} parent=1 // pred_region
      %66 = dma.done [#allocation4], 256
    $region25: #{tpu_custom_call.1} parent=1 // pred_fallthru
      _
    // Predicated region
    $region26: #{tpu_custom_call.1} parent=1 // pred_check
      _
    $region27: #{tpu_custom_call.1} parent=1 // pred_check_branch
      %68 = sbr.rel (0) target = $region29
    $region28: #{tpu_custom_call.1} parent=1 // pred_region
      %69 = dma.done [#allocation7], 2048
    $region29: #{tpu_custom_call.1} parent=1 // pred_fallthru
      _
    // Predicated region
    $region30: #{tpu_custom_call.1} parent=1 // pred_check
      _
    $region31: #{tpu_custom_call.1} parent=1 // pred_check_branch
      %71 = sbr.rel (0) target = $region33
    $region32: #{tpu_custom_call.1} parent=1 // pred_region
      %72 = dma.done [#allocation7], 256
    $region33: #{tpu_custom_call.1} parent=1 // pred_fallthru
      _
    // Predicated region
    $region34: #{tpu_custom_call.1} parent=1 // pred_check
      _
    $region35: #{tpu_custom_call.1} parent=1 // pred_check_branch
      %74 = sbr.rel (0) target = $region37
    $region36: #{tpu_custom_call.1} parent=1 // pred_region
      %75 = dma.done [#allocation10], 2048
    $region37: #{tpu_custom_call.1} parent=1 // pred_fallthru
      _
    %p76 = scmp.eq.s32.totalorder 0, 0
    // Predicated region
    $region38: #{tpu_custom_call.1} parent=1 // pred_check
      %p77 = pneg %p76
    $region39: #{tpu_custom_call.1} parent=1 // pred_check_branch
      %79 = sbr.rel (%p77) target = $region41
    $region40: #{tpu_custom_call.1} parent=1 // pred_region
      %80 = vst [vmem:[#allocation2] sm:$0xff] 0.0
      %81 = vst [vmem:[#allocation2 + $0x8] sm:$0xff] 0.0
    $region41: #{tpu_custom_call.1} parent=1 // pred_fallthru
      _
    %v82 = vld [vmem:[#allocation2] sm:$0xff]
    %v83 = vld [vmem:[#allocation2 + $0x8] sm:$0xff]
    %v84 = vld [vmem:[#allocation3] sm:$0xff]
    %v85 = vld [vmem:[#allocation3 + $0x8] sm:$0xff]
    %v86 = vld [vmem:[#allocation6] sm:$0xff]
    %v87 = vld [vmem:[#allocation6 + $0x8] sm:$0xff]
    %v88 = vld [vmem:[#allocation6 + $0x10] sm:$0xff]
    %v89 = vld [vmem:[#allocation6 + $0x18] sm:$0xff]
    %v90 = vld [vmem:[#allocation6 + $0x20] sm:$0xff]
    %v91 = vld [vmem:[#allocation6 + $0x28] sm:$0xff]
    %v92 = vld [vmem:[#allocation6 + $0x30] sm:$0xff]
    %v93 = vld [vmem:[#allocation6 + $0x38] sm:$0xff]
    %v94 = vld [vmem:[#allocation6 + $0x40] sm:$0xff]
    %v95 = vld [vmem:[#allocation6 + $0x48] sm:$0xff]
    %v96 = vld [vmem:[#allocation6 + $0x50] sm:$0xff]
    %v97 = vld [vmem:[#allocation6 + $0x58] sm:$0xff]
    %v98 = vld [vmem:[#allocation6 + $0x60] sm:$0xff]
    %v99 = vld [vmem:[#allocation6 + $0x68] sm:$0xff]
    %v100 = vld [vmem:[#allocation6 + $0x70] sm:$0xff]
    %v101 = vld [vmem:[#allocation6 + $0x78] sm:$0xff]
    %102 = vmatprep.subr.mxu0 0.0
    %103 = vmatpush1.xpose.msra.mxu0 %v86
    %104 = vmatprep.subr.mxu0 0.0
    %105 = vmatpush1.xpose.msra.mxu0 %v87
    %106 = vmatprep.subr.mxu0 0.0
    %107 = vmatpush1.xpose.msra.mxu0 %v88
    %108 = vmatprep.subr.mxu0 0.0
    %109 = vmatpush1.xpose.msra.mxu0 %v89
    %110 = vmatprep.subr.mxu0 0.0
    %111 = vmatpush1.xpose.msra.mxu0 %v90
    %112 = vmatprep.subr.mxu0 0.0
    %113 = vmatpush1.xpose.msra.mxu0 %v91
    %114 = vmatprep.subr.mxu0 0.0
    %115 = vmatpush1.xpose.msra.mxu0 %v92
    %116 = vmatprep.subr.mxu0 0.0
    %117 = vmatpush1.xpose.msra.mxu0 %v93
    %118 = vmatprep.subr.mxu0 0.0
    %119 = vmatpush1.xpose.msra.mxu0 %v94
    %120 = vmatprep.subr.mxu0 0.0
    %121 = vmatpush1.xpose.msra.mxu0 %v95
    %122 = vmatprep.subr.mxu0 0.0
    %123 = vmatpush1.xpose.msra.mxu0 %v96
    %124 = vmatprep.subr.mxu0 0.0
    %125 = vmatpush1.xpose.msra.mxu0 %v97
    %126 = vmatprep.subr.mxu0 0.0
    %127 = vmatpush1.xpose.msra.mxu0 %v98
    %128 = vmatprep.subr.mxu0 0.0
    %129 = vmatpush1.xpose.msra.mxu0 %v99
    %130 = vmatprep.subr.mxu0 0.0
    %131 = vmatpush1.xpose.msra.mxu0 %v100
    %132 = vmatprep.subr.mxu0 0.0
    %133 = vmatpush1.xpose.msra.mxu0 %v101
    %134 = vmatprep.subr.mxu0 0.0
    %135 = vmatpush1.xpose.msra.mxu0 0.0
    %136 = vmatprep.subr.mxu0 0.0
    %137 = vmatpush1.xpose.msra.mxu0 0.0
    %138 = vmatprep.subr.mxu0 0.0
    %139 = vmatpush1.xpose.msra.mxu0 0.0
    %140 = vmatprep.subr.mxu0 0.0
    %141 = vmatpush1.xpose.msra.mxu0 0.0
    %142 = vmatprep.subr.mxu0 0.0
    %143 = vmatpush1.xpose.msra.mxu0 0.0
    %144 = vmatprep.subr.mxu0 0.0
    %145 = vmatpush1.xpose.msra.mxu0 0.0
    %146 = vmatprep.subr.mxu0 0.0
    %147 = vmatpush1.xpose.msra.mxu0 0.0
    %148 = vmatprep.subr.mxu0 0.0
    %149 = vmatpush1.xpose.msra.mxu0 0.0
    %150 = vmatprep.subr.mxu0 0.0
    %151 = vmatpush1.xpose.msra.mxu0 0.0
    %152 = vmatprep.subr.mxu0 0.0
    %153 = vmatpush1.xpose.msra.mxu0 0.0
    %154 = vmatprep.subr.mxu0 0.0
    %155 = vmatpush1.xpose.msra.mxu0 0.0
    %156 = vmatprep.subr.mxu0 0.0
    %157 = vmatpush1.xpose.msra.mxu0 0.0
    %158 = vmatprep.subr.mxu0 0.0
    %159 = vmatpush1.xpose.msra.mxu0 0.0
    %160 = vmatprep.subr.mxu0 0.0
    %161 = vmatpush1.xpose.msra.mxu0 0.0
    %162 = vmatprep.subr.mxu0 0.0
    %163 = vmatpush1.xpose.msra.mxu0 0.0
    %164 = vmatprep.subr.mxu0 0.0
    %165 = vmatpush1.xpose.msra.mxu0 0.0
    %166 = vmatprep.mubr.f32.mxu0 0.0
    %167 = vmatmul.mubr.f32.gmra.mrb[0].mxu0 %v84
    %v168 = vpop.f32.mrb[0].mxu0
    %v169 = vadd.f32 0.0, %v168
    %v170 = vpop.f32.mrb[0].mxu0
    %171 = vmatprep.mubr.f32.mxu0 0.0
    %172 = vmatmul.mubr.f32.gmra.mrb[0].mxu0 %v85
    %v173 = vpop.f32.mrb[0].mxu0
    %v174 = vadd.f32 0.0, %v173
    %v175 = vpop.f32.mrb[0].mxu0
    %176 = vdwg.mxu0
    %v177 = vadd.f32 %v82, %v169
    %v178 = vadd.f32 %v83, %v174
    %179 = vst [vmem:[#allocation2] sm:$0xff] %v177
    %180 = vst [vmem:[#allocation2 + $0x8] sm:$0xff] %v178
    // Predicated region
    $region42: #{tpu_custom_call.1} parent=1 // pred_check
      %p181 = pneg %p76
    $region43: #{tpu_custom_call.1} parent=1 // pred_check_branch
      %183 = sbr.rel (%p181) target = $region45
    $region44: #{tpu_custom_call.1} parent=1 // pred_region
      %v184 = vld [vmem:[#allocation8] sm:$0xff]
      %v185 = vld [vmem:[#allocation8 + $0x8] sm:$0xff]
      %v186 = vld [vmem:[#allocation9] sm:$0xff]
      %v187 = vld [vmem:[#allocation9 + $0x8] sm:$0xff]
      %v188 = vld [vmem:[#allocation9 + $0x10] sm:$0xff]
      %v189 = vld [vmem:[#allocation9 + $0x18] sm:$0xff]
      %v190 = vld [vmem:[#allocation9 + $0x20] sm:$0xff]
      %v191 = vld [vmem:[#allocation9 + $0x28] sm:$0xff]
      %v192 = vld [vmem:[#allocation9 + $0x30] sm:$0xff]
      %v193 = vld [vmem:[#allocation9 + $0x38] sm:$0xff]
      %v194 = vld [vmem:[#allocation9 + $0x40] sm:$0xff]
      %v195 = vld [vmem:[#allocation9 + $0x48] sm:$0xff]
      %v196 = vld [vmem:[#allocation9 + $0x50] sm:$0xff]
      %v197 = vld [vmem:[#allocation9 + $0x58] sm:$0xff]
      %v198 = vld [vmem:[#allocation9 + $0x60] sm:$0xff]
      %v199 = vld [vmem:[#allocation9 + $0x68] sm:$0xff]
      %v200 = vld [vmem:[#allocation9 + $0x70] sm:$0xff]
      %v201 = vld [vmem:[#allocation9 + $0x78] sm:$0xff]
      %202 = vmatprep.subr.mxu0 0.0
      %203 = vmatpush1.xpose.msra.mxu0 %v186
      %204 = vmatprep.subr.mxu0 0.0
      %205 = vmatpush1.xpose.msra.mxu0 %v187
      %206 = vmatprep.subr.mxu0 0.0
      %207 = vmatpush1.xpose.msra.mxu0 %v188
      %208 = vmatprep.subr.mxu0 0.0
      %209 = vmatpush1.xpose.msra.mxu0 %v189
      %210 = vmatprep.subr.mxu0 0.0
      %211 = vmatpush1.xpose.msra.mxu0 %v190
      %212 = vmatprep.subr.mxu0 0.0
      %213 = vmatpush1.xpose.msra.mxu0 %v191
      %214 = vmatprep.subr.mxu0 0.0
      %215 = vmatpush1.xpose.msra.mxu0 %v192
      %216 = vmatprep.subr.mxu0 0.0
      %217 = vmatpush1.xpose.msra.mxu0 %v193
      %218 = vmatprep.subr.mxu0 0.0
      %219 = vmatpush1.xpose.msra.mxu0 %v194
      %220 = vmatprep.subr.mxu0 0.0
      %221 = vmatpush1.xpose.msra.mxu0 %v195
      %222 = vmatprep.subr.mxu0 0.0
      %223 = vmatpush1.xpose.msra.mxu0 %v196
      %224 = vmatprep.subr.mxu0 0.0
      %225 = vmatpush1.xpose.msra.mxu0 %v197
      %226 = vmatprep.subr.mxu0 0.0
      %227 = vmatpush1.xpose.msra.mxu0 %v198
      %228 = vmatprep.subr.mxu0 0.0
      %229 = vmatpush1.xpose.msra.mxu0 %v199
      %230 = vmatprep.subr.mxu0 0.0
      %231 = vmatpush1.xpose.msra.mxu0 %v200
      %232 = vmatprep.subr.mxu0 0.0
      %233 = vmatpush1.xpose.msra.mxu0 %v201
      %234 = vmatprep.subr.mxu0 0.0
      %235 = vmatpush1.xpose.msra.mxu0 0.0
      %236 = vmatprep.subr.mxu0 0.0
      %237 = vmatpush1.xpose.msra.mxu0 0.0
      %238 = vmatprep.subr.mxu0 0.0
      %239 = vmatpush1.xpose.msra.mxu0 0.0
      %240 = vmatprep.subr.mxu0 0.0
      %241 = vmatpush1.xpose.msra.mxu0 0.0
      %242 = vmatprep.subr.mxu0 0.0
      %243 = vmatpush1.xpose.msra.mxu0 0.0
      %244 = vmatprep.subr.mxu0 0.0
      %245 = vmatpush1.xpose.msra.mxu0 0.0
      %246 = vmatprep.subr.mxu0 0.0
      %247 = vmatpush1.xpose.msra.mxu0 0.0
      %248 = vmatprep.subr.mxu0 0.0
      %249 = vmatpush1.xpose.msra.mxu0 0.0
      %250 = vmatprep.subr.mxu0 0.0
      %251 = vmatpush1.xpose.msra.mxu0 0.0
      %252 = vmatprep.subr.mxu0 0.0
      %253 = vmatpush1.xpose.msra.mxu0 0.0
      %254 = vmatprep.subr.mxu0 0.0
      %255 = vmatpush1.xpose.msra.mxu0 0.0
      %256 = vmatprep.subr.mxu0 0.0
      %257 = vmatpush1.xpose.msra.mxu0 0.0
      %258 = vmatprep.subr.mxu0 0.0
      %259 = vmatpush1.xpose.msra.mxu0 0.0
      %260 = vmatprep.subr.mxu0 0.0
      %261 = vmatpush1.xpose.msra.mxu0 0.0
      %262 = vmatprep.subr.mxu0 0.0
      %263 = vmatpush1.xpose.msra.mxu0 0.0
      %264 = vmatprep.subr.mxu0 0.0
      %265 = vmatpush1.xpose.msra.mxu0 0.0
      %266 = vmatprep.mubr.f32.mxu0 0.0
      %267 = vmatmul.mubr.f32.gmra.mrb[0].mxu0 %v184
      %v268 = vpop.f32.mrb[0].mxu0
      %v269 = vadd.f32 0.0, %v268
      %v270 = vpop.f32.mrb[0].mxu0
      %271 = vmatprep.mubr.f32.mxu0 0.0
      %272 = vmatmul.mubr.f32.gmra.mrb[0].mxu0 %v185
      %v273 = vpop.f32.mrb[0].mxu0
      %v274 = vadd.f32 0.0, %v273
      %v275 = vpop.f32.mrb[0].mxu0
      %276 = vdwg.mxu0
      %v277 = vld [vmem:[#allocation2] sm:$0xff]
      %v278 = vld [vmem:[#allocation2 + $0x8] sm:$0xff]
      %v279 = vadd.f32 %v277, %v269
      %v280 = vadd.f32 %v278, %v274
      %v281 = vld [vmem:[%s4] sm:$0x1]
      %v283 = vlaneseq
      %v284 = vshrl.u32 %v283, 7
      %v285 = vsub.s32 0, %v284
      %v286 = vrot.slane %v281, %v285
      %v288 = vadd.f32 %v279, %v286
      %v289 = vadd.f32 %v280, %v286
      %290 = vst [vmem:[#allocation11] sm:$0xff] %v288
      %291 = vst [vmem:[#allocation11 + $0x8] sm:$0xff] %v289
    $region45: #{tpu_custom_call.1} parent=1 // pred_fallthru
      _
    // Predicated region
    $region46: #{tpu_custom_call.1} parent=1 // pred_check
      _
    $region47: #{tpu_custom_call.1} parent=1 // pred_check_branch
      %293 = sbr.rel (0) target = $region49
    $region48: #{tpu_custom_call.1} parent=1 // pred_region
      %s295 = ssub.s32 256, 256
      %296 = vsyncadd [#allocation5], %s295
      %s297 = sshll.u32 [#allocation11], 4
      %s298 = int_to_ptr.vmem [resolvable:$true] %s297
      %303 = dma.vmem_to_hbm [thread:$0]  %s298, 256, %s5, [#allocation5], 128, 128, 8
    $region49: #{tpu_custom_call.1} parent=1 // pred_fallthru
      _
    // Predicated region
    $region50: #{tpu_custom_call.1} parent=1 // pred_check
      _
    $region51: #{tpu_custom_call.1} parent=1 // pred_check_branch
      %305 = sbr.rel (0) target = $region53
    $region52: #{tpu_custom_call.1} parent=1 // pred_region
      %306 = dma.done [#allocation5], 256
    $region53: #{tpu_custom_call.1} parent=1 // pred_fallthru
      _
    %307 = vsyncpa [#allocation4], 1
    %308 = vsyncpa [#allocation7], 1
    %309 = vsyncpa [#allocation10], 1
    %310 = vsyncpa [#allocation5], 1

</llo_original>
